<compile_context>
chip_gen: v7x
topology: tpu7x:2x2x1
jax: 0.10.0
libtpu: 0.0.40
codegen_flags: <defaults>
</compile_context>

<pallas_src>
import math

import jax
import jax.numpy as jnp
from jax.experimental import pallas as pl
from jax.experimental.pallas import tpu as pltpu


# ---------------------------------------------------------------------------
# Fused local-aggregator + attr_sess kernel — one block of `bt` sessions/step.
# ---------------------------------------------------------------------------
def _local_agg_kernel(hcat_ref, adj_ref, a_ref, attr_ref, wbd_ref,
                      out_ref, attr_out_ref):
    """hcat_ref: (bt, N, 2D) f32 = [h, |h|];  adj_ref: (bt, N, N) i32;
    a_ref: (4, 2D) f32 = [c1*a_k, c2*a_k];  attr_ref: (bt, N*Amax) f32;
    wbd_ref: (N*Amax, N*D) f32 block-diag attr_embedding;
    out_ref / attr_out_ref: (bt, N*D) f32 (lane-dense)."""
    bt, n, d2 = hcat_ref.shape
    d = d2 // 2

    hcat = hcat_ref[...]                      # (bt, N, 2D) f32
    a_cat = a_ref[...]                        # (4, 2D)  f32, c1/c2 pre-folded

    # One fused K=2D contraction producing all four attention score maps:
    #   e[b, k*N + i, j] = sum_d' (a_cat[k,d'] * hcat[b,i,d']) * hcat[b,j,d']
    lhs = (hcat[:, None, :, :] * a_cat[None, :, None, :]).reshape(bt, 4 * n, d2)
    e = jnp.einsum('bmd,bjd->bmj',
                   lhs.astype(jnp.bfloat16), hcat.astype(jnp.bfloat16),
                   preferred_element_type=jnp.float32)          # (bt, 4N, N)

    adj = adj_ref[...]                        # (bt, N, N) i32
    neg = jnp.float32(-9e15)
    logits = jnp.where(adj == 1, e[:, 0 * n:1 * n, :], neg)
    logits = jnp.where(adj == 2, e[:, 1 * n:2 * n, :], logits)
    logits = jnp.where(adj == 3, e[:, 2 * n:3 * n, :], logits)
    logits = jnp.where(adj == 4, e[:, 3 * n:4 * n, :], logits)

    # softmax over source nodes (EUP reciprocal instead of a VALU divide)
    m = jnp.max(logits, axis=-1, keepdims=True)
    ex = jnp.exp(logits - m)
    attn = ex * pl.reciprocal(jnp.sum(ex, axis=-1, keepdims=True), approx=True)

    # attn @ h as N unrolled VPU FMAs (each per-session matmul is only 8x8x32,
    # <1% MXU utilisation; VPU FMAs are cheaper and keep the vex slot free).
    h = hcat[:, :, :d]                        # (bt, N, D) f32
    out = attn[:, :, 0:1] * h[:, 0:1, :]
    for j in range(1, n):
        out = out + attn[:, :, j:j + 1] * h[:, j:j + 1, :]
    # lane-dense store: node i's D-slice goes to lanes [i*D, (i+1)*D)
    for i in range(n):
        out_ref[:, i * d:(i + 1) * d] = out[:, i, :].astype(out_ref.dtype)

    # attr_sess: one lane-dense (bt, N*Amax) @ (N*Amax, N*D) block-diag matmul
    # (f32 operands to keep exact parity with the XLA reference).
    attr_out_ref[...] = jnp.dot(
        attr_ref[...], wbd_ref[...],
        preferred_element_type=jnp.float32).astype(attr_out_ref.dtype)


def _round_up(x, m):
    return ((x + m - 1) // m) * m


def _pick_tiling(batch):
    """(block_b, n_steps, vmem_limit_bytes).  Sized per TPU generation and
    chosen so the last grid step carries at most 7 padded sessions, with
    >= 2 grid steps whenever batch > target (megacore / v7x 2-TC sharding)."""
    try:
        info = pltpu.get_tpu_info()
        vmem = int(getattr(info, "vmem_capacity_bytes", 64 * 1024 * 1024))
    except Exception:                       # be robust if the query fails
        vmem = 64 * 1024 * 1024
    if vmem >= 96 * 1024 * 1024:            # v5e / v6e: 128 MiB physical VMEM
        target, limit = 256, 64 * 1024 * 1024
    else:                                   # v7x: 64 MiB physical VMEM
        target, limit = 128, 32 * 1024 * 1024
    if batch <= target:
        return batch, 1, limit
    n_steps = -(-batch // target)
    bt = _round_up(-(-batch // n_steps), 8)   # divisor-friendly: padding < 8
    return bt, n_steps, limit


# ---------------------------------------------------------------------------
# Wrapper: LocalAggregator.forward -> (output, attr_sess)
# ---------------------------------------------------------------------------
def local_aggregator_forward(hidden, adj, a_stack, A_attr_sess, attr_embedding,
                             *, alpha_slope, block_b=None):
    B, N, D = hidden.shape
    Amax = A_attr_sess.shape[-1]
    f32 = jnp.float32

    hidden = hidden.astype(f32)
    adj = adj.astype(jnp.int32)
    a = a_stack.astype(f32)                                     # (4, D)

    # Fold the LeakyReLU split LeakyReLU(z) = c1*z + c2*|z| into the weights.
    c1 = 0.5 * (1.0 + alpha_slope)
    c2 = 0.5 * (1.0 - alpha_slope)
    a_cat = jnp.concatenate([c1 * a, c2 * a], axis=-1)          # (4, 2D)
    hcat = jnp.concatenate([hidden, jnp.abs(hidden)], axis=-1)  # (B, N, 2D)

    # attr_sess weights as a block-diagonal matrix so the whole contraction is
    # one lane-dense matmul:  W_bd[n*Amax + a, n*D + d] = attr_embedding[a, d]
    attr_flat = A_attr_sess.astype(f32).reshape(B, N * Amax)    # (B, N*Amax)
    w_bd = jnp.kron(jnp.eye(N, dtype=f32), attr_embedding.astype(f32))

    if block_b is None:
        bt, n_steps, vmem_limit = _pick_tiling(B)
    else:
        bt = max(1, min(int(block_b), B))
        if bt < B:
            bt = _round_up(bt, 8)
        n_steps = -(-B // bt)
        vmem_limit = 64 * 1024 * 1024
    Bp = bt * n_steps
    if Bp != B:                      # padded sessions are sliced off below
        pad = Bp - B
        hcat = jnp.pad(hcat, ((0, pad), (0, 0), (0, 0)))
        adj = jnp.pad(adj, ((0, pad), (0, 0), (0, 0)))
        attr_flat = jnp.pad(attr_flat, ((0, pad), (0, 0)))

    flops = 2 * Bp * (4 * N) * N * (2 * D)        # fused e contraction (MXU)
    flops += 2 * Bp * N * N * D                   # attn @ h (VPU FMAs)
    flops += 2 * Bp * (N * Amax) * (N * D)        # block-diag attr matmul
    bytes_accessed = 4 * (hcat.size + adj.size + attr_flat.size + a_cat.size
                          + w_bd.size + 2 * Bp * N * D)

    out_flat, attr_out_flat = pl.pallas_call(
        _local_agg_kernel,
        out_shape=(jax.ShapeDtypeStruct((Bp, N * D), f32),
                   jax.ShapeDtypeStruct((Bp, N * D), f32)),
        grid=(n_steps,),
        in_specs=[
            pl.BlockSpec((bt, N, 2 * D), lambda b: (b, 0, 0)),   # [h, |h|]
            pl.BlockSpec((bt, N, N), lambda b: (b, 0, 0)),       # adjacency
            pl.BlockSpec((4, 2 * D), lambda b: (0, 0)),          # [c1*a, c2*a]
            pl.BlockSpec((bt, N * Amax), lambda b: (b, 0)),      # attr (lane-dense)
            pl.BlockSpec((N * Amax, N * D), lambda b: (0, 0)),   # block-diag weights
        ],
        out_specs=(
            pl.BlockSpec((bt, N * D), lambda b: (b, 0)),         # hidden (lane-dense)
            pl.BlockSpec((bt, N * D), lambda b: (b, 0)),         # attr_sess (lane-dense)
        ),
        compiler_params=pltpu.CompilerParams(
            dimension_semantics=("parallel",),
            vmem_limit_bytes=vmem_limit),
        cost_estimate=pl.CostEstimate(flops=int(flops),
                                      transcendentals=int(Bp * N * N),
                                      bytes_accessed=int(bytes_accessed)),
    )(hcat, adj, a_cat, attr_flat, w_bd)

    output = out_flat[:B].reshape(B, N, D)
    attr_sess = attr_out_flat[:B].reshape(B, N, D)
    return output, attr_sess


# ---------------------------------------------------------------------------
# Full forward (mirrors SessionGraph.forward / LocalAggregator.forward)
# ---------------------------------------------------------------------------
def session_graph_forward(params, inputs, A, mask_item, A_attr_sess, *,
                          alpha_slope):
    del mask_item  # unused by LocalAggregator.forward, as in the reference
    # TODO(synk): the embedding gather stays in XLA; rows are only D=32 floats
    # and a scalar-prefetch in-kernel gather would not pay for itself here.
    node_embeds = params["embedding"][inputs]                    # (B, N, D)
    return local_aggregator_forward(
        node_embeds, A, params["a_stack"], A_attr_sess,
        params["attr_embedding"], alpha_slope=alpha_slope)


def _reference_forward(params, inputs, A, A_attr_sess, alpha_slope):
    """Pure-JAX reference matching the PyTorch semantics."""
    h = params["embedding"][inputs].astype(jnp.float32)          # (B,N,D)
    a = params["a_stack"].astype(jnp.float32)                    # (4,D)
    prod = h[:, :, None, :] * h[:, None, :, :]                   # (B,N,N,D)
    ai = jnp.where(prod >= 0, prod, alpha_slope * prod)
    e = jnp.einsum('bijd,kd->bijk', ai, a)                       # (B,N,N,4)
    adj = A.astype(jnp.int32)
    neg = jnp.full(adj.shape, -9e15, jnp.float32)
    logits = jnp.where(adj == 1, e[..., 0], neg)
    logits = jnp.where(adj == 2, e[..., 1], logits)
    logits = jnp.where(adj == 3, e[..., 2], logits)
    logits = jnp.where(adj == 4, e[..., 3], logits)
    attn = jax.nn.softmax(logits, axis=-1)
    hidden = jnp.einsum('bij,bjd->bid', attn, h)
    attr_sess = jnp.einsum('bna,ad->bnd',
                           A_attr_sess.astype(jnp.float32),
                           params["attr_embedding"].astype(jnp.float32))
    return hidden, attr_sess


if __name__ == "__main__":
    # Small, forward-consistent shapes.
    B, N = 2, 8              # batch, session length
    D = 32                   # hiddenSize
    n_node = 20              # item vocab
    max_attr = 16            # attribute vocab
    alpha_slope = 0.2        # opt.alpha (LeakyReLU slope)

    stdv = 1.0 / math.sqrt(D)
    key = jax.random.PRNGKey(0)
    k_emb, k_attr, k_a, k_in, k_adj, k_attradj = jax.random.split(key, 6)

    params = {
        "embedding": jax.random.uniform(k_emb, (n_node, D), jnp.float32,
                                        -stdv, stdv),
        "attr_embedding": jax.random.uniform(k_attr, (max_attr, D), jnp.float32,
                                             -stdv, stdv),
        # rows are a_0, a_1, a_2, a_3 (each originally (D, 1))
        "a_stack": jax.random.uniform(k_a, (4, D), jnp.float32, -stdv, stdv),
    }

    inputs = jax.random.randint(k_in, (B, N), 0, n_node, jnp.int32)
    A = jax.random.randint(k_adj, (B, N, N), 0, 5, jnp.int32)
    mask_item = jnp.ones((B, N), jnp.int32)
    A_attr_sess = jax.random.uniform(k_attradj, (B, N, max_attr), jnp.float32)

    hidden, attr_sess = session_graph_forward(
        params, inputs, A, mask_item, A_attr_sess, alpha_slope=alpha_slope)
    jax.block_until_ready((hidden, attr_sess))

    ref_hidden, ref_attr = _reference_forward(params, inputs, A, A_attr_sess,
                                              alpha_slope)
    assert hidden.shape == (B, N, D) and attr_sess.shape == (B, N, D)
    # Looser tolerance for `hidden`: the fused MXU contraction uses bf16
    # operands (f32 accumulation) and the softmax uses an approximate EUP
    # reciprocal; with D=32 the observed error stays orders below 2e-3.
    assert jnp.allclose(hidden, ref_hidden, rtol=2e-3, atol=2e-3)
    assert jnp.allclose(attr_sess, ref_attr, rtol=1e-5, atol=1e-5)
    print("KERNEL_OK")
</pallas_src>

<mosaic_0001>
module attributes {stable_mosaic.version = 11 : i64} {
  func.func @_local_agg_kernel(%arg0: i32, %arg1: memref<2x8x64xf32, #tpu.memory_space<vmem>>, %arg2: memref<2x8x8xi32, #tpu.memory_space<vmem>>, %arg3: memref<4x64xf32, #tpu.memory_space<vmem>>, %arg4: memref<2x128xf32, #tpu.memory_space<vmem>>, %arg5: memref<128x256xf32, #tpu.memory_space<vmem>>, %arg6: memref<2x256xf32, #tpu.memory_space<vmem>>, %arg7: memref<2x256xf32, #tpu.memory_space<vmem>>) attributes {dimension_semantics = [#tpu.dimension_semantics<parallel>], iteration_bounds = array<i64: 1>, scalar_prefetch = 0 : i64, scratch_operands = 0 : i64, tpu.core_type = #tpu.core_type<tc>, window_params = [{transform_indices = @transform_0, window_bounds = array<i64: 2, 8, 64>}, {transform_indices = @transform_1, window_bounds = array<i64: 2, 8, 8>}, {pipeline_mode = #tpu.pipeline_mode<synchronous>, transform_indices = @transform_2, window_bounds = array<i64: 4, 64>}, {transform_indices = @transform_3, window_bounds = array<i64: 2, 128>}, {pipeline_mode = #tpu.pipeline_mode<synchronous>, transform_indices = @transform_4, window_bounds = array<i64: 128, 256>}, {transform_indices = @transform_5, window_bounds = array<i64: 2, 256>}, {transform_indices = @transform_6, window_bounds = array<i64: 2, 256>}]} {
    %c0 = arith.constant 0 : index
    %c0_0 = arith.constant 0 : index
    %c0_1 = arith.constant 0 : index
    %0 = vector.load %arg1[%c0, %c0_0, %c0_1] : memref<2x8x64xf32, #tpu.memory_space<vmem>>, vector<2x8x64xf32>
    %c0_2 = arith.constant 0 : index
    %c0_3 = arith.constant 0 : index
    %1 = vector.load %arg3[%c0_2, %c0_3] : memref<4x64xf32, #tpu.memory_space<vmem>>, vector<4x64xf32>
    %2 = vector.shape_cast %0 : vector<2x8x64xf32> to vector<2x1x8x64xf32>
    %3 = vector.shape_cast %1 : vector<4x64xf32> to vector<1x4x1x64xf32>
    %4 = vector.broadcast %2 : vector<2x1x8x64xf32> to vector<2x4x8x64xf32>
    %5 = vector.broadcast %3 : vector<1x4x1x64xf32> to vector<2x4x8x64xf32>
    %6 = arith.mulf %4, %5 : vector<2x4x8x64xf32>
    %7 = vector.shape_cast %6 : vector<2x4x8x64xf32> to vector<2x32x64xf32>
    %8 = arith.truncf %7 : vector<2x32x64xf32> to vector<2x32x64xbf16>
    %9 = arith.truncf %0 : vector<2x8x64xf32> to vector<2x8x64xbf16>
    "tpu.trace_start"() <{level = 10 : i32, message = "bmd,bjd->bmj"}> : () -> ()
    %cst = arith.constant dense<0.000000e+00> : vector<2x32x8xf32>
    %10 = tpu.matmul %8, %9, %cst {dimension_numbers = #tpu.dot_dimension_numbers<[2], [2], [1], [1], [0, 0, 0, 1, 1, 1], [0], [0]>} : vector<2x32x64xbf16>, vector<2x8x64xbf16>, vector<2x32x8xf32> -> vector<2x32x8xf32>
    "tpu.trace_stop"() : () -> ()
    %c0_4 = arith.constant 0 : index
    %c0_5 = arith.constant 0 : index
    %c0_6 = arith.constant 0 : index
    %11 = vector.load %arg2[%c0_4, %c0_5, %c0_6] : memref<2x8x8xi32, #tpu.memory_space<vmem>>, vector<2x8x8xi32>
    %c1_i32 = arith.constant 1 : i32
    %12 = vector.broadcast %c1_i32 : i32 to vector<2x8x8xi32>
    %13 = arith.cmpi eq, %11, %12 : vector<2x8x8xi32>
    %14 = vector.extract_strided_slice %10 {offsets = [0, 0, 0], sizes = [2, 8, 8], strides = [1, 1, 1]} : vector<2x32x8xf32> to vector<2x8x8xf32>
    %cst_7 = arith.constant -9.000000e+15 : f32
    %15 = vector.broadcast %cst_7 : f32 to vector<2x8x8xf32>
    %16 = arith.select %13, %14, %15 : vector<2x8x8xi1>, vector<2x8x8xf32>
    %c2_i32 = arith.constant 2 : i32
    %17 = vector.broadcast %c2_i32 : i32 to vector<2x8x8xi32>
    %18 = arith.cmpi eq, %11, %17 : vector<2x8x8xi32>
    %19 = vector.extract_strided_slice %10 {offsets = [0, 8, 0], sizes = [2, 8, 8], strides = [1, 1, 1]} : vector<2x32x8xf32> to vector<2x8x8xf32>
    %20 = arith.select %18, %19, %16 : vector<2x8x8xi1>, vector<2x8x8xf32>
    %c3_i32 = arith.constant 3 : i32
    %21 = vector.broadcast %c3_i32 : i32 to vector<2x8x8xi32>
    %22 = arith.cmpi eq, %11, %21 : vector<2x8x8xi32>
    %23 = vector.extract_strided_slice %10 {offsets = [0, 16, 0], sizes = [2, 8, 8], strides = [1, 1, 1]} : vector<2x32x8xf32> to vector<2x8x8xf32>
    %24 = arith.select %22, %23, %20 : vector<2x8x8xi1>, vector<2x8x8xf32>
    %c4_i32 = arith.constant 4 : i32
    %25 = vector.broadcast %c4_i32 : i32 to vector<2x8x8xi32>
    %26 = arith.cmpi eq, %11, %25 : vector<2x8x8xi32>
    %27 = vector.extract_strided_slice %10 {offsets = [0, 24, 0], sizes = [2, 8, 8], strides = [1, 1, 1]} : vector<2x32x8xf32> to vector<2x8x8xf32>
    %28 = arith.select %26, %27, %24 : vector<2x8x8xi1>, vector<2x8x8xf32>
    %cst_8 = arith.constant dense<0xFF800000> : vector<2x8xf32>
    %29 = vector.multi_reduction <maximumf>, %28, %cst_8 [2] : vector<2x8x8xf32> to vector<2x8xf32>
    %30 = vector.shape_cast %29 : vector<2x8xf32> to vector<2x8x1xf32>
    %31 = vector.broadcast %30 : vector<2x8x1xf32> to vector<2x8x8xf32>
    %32 = arith.subf %28, %31 : vector<2x8x8xf32>
    %33 = math.exp %32 : vector<2x8x8xf32>
    %cst_9 = arith.constant dense<0.000000e+00> : vector<2x8xf32>
    %34 = vector.multi_reduction <add>, %33, %cst_9 [2] : vector<2x8x8xf32> to vector<2x8xf32>
    %35 = vector.shape_cast %34 : vector<2x8xf32> to vector<2x8x1xf32>
    %36 = tpu.reciprocal %35 {approx = true} : vector<2x8x1xf32> -> vector<2x8x1xf32>
    %37 = vector.broadcast %36 : vector<2x8x1xf32> to vector<2x8x8xf32>
    %38 = arith.mulf %33, %37 : vector<2x8x8xf32>
    %39 = vector.extract_strided_slice %0 {offsets = [0, 0, 0], sizes = [2, 8, 32], strides = [1, 1, 1]} : vector<2x8x64xf32> to vector<2x8x32xf32>
    %40 = vector.extract_strided_slice %38 {offsets = [0, 0, 0], sizes = [2, 8, 1], strides = [1, 1, 1]} : vector<2x8x8xf32> to vector<2x8x1xf32>
    %41 = vector.extract_strided_slice %39 {offsets = [0, 0, 0], sizes = [2, 1, 32], strides = [1, 1, 1]} : vector<2x8x32xf32> to vector<2x1x32xf32>
    %42 = vector.broadcast %40 : vector<2x8x1xf32> to vector<2x8x32xf32>
    %43 = vector.broadcast %41 : vector<2x1x32xf32> to vector<2x8x32xf32>
    %44 = arith.mulf %42, %43 : vector<2x8x32xf32>
    %45 = vector.extract_strided_slice %38 {offsets = [0, 0, 1], sizes = [2, 8, 1], strides = [1, 1, 1]} : vector<2x8x8xf32> to vector<2x8x1xf32>
    %46 = vector.extract_strided_slice %39 {offsets = [0, 1, 0], sizes = [2, 1, 32], strides = [1, 1, 1]} : vector<2x8x32xf32> to vector<2x1x32xf32>
    %47 = vector.broadcast %45 : vector<2x8x1xf32> to vector<2x8x32xf32>
    %48 = vector.broadcast %46 : vector<2x1x32xf32> to vector<2x8x32xf32>
    %49 = arith.mulf %47, %48 : vector<2x8x32xf32>
    %50 = arith.addf %44, %49 : vector<2x8x32xf32>
    %51 = vector.extract_strided_slice %38 {offsets = [0, 0, 2], sizes = [2, 8, 1], strides = [1, 1, 1]} : vector<2x8x8xf32> to vector<2x8x1xf32>
    %52 = vector.extract_strided_slice %39 {offsets = [0, 2, 0], sizes = [2, 1, 32], strides = [1, 1, 1]} : vector<2x8x32xf32> to vector<2x1x32xf32>
    %53 = vector.broadcast %51 : vector<2x8x1xf32> to vector<2x8x32xf32>
    %54 = vector.broadcast %52 : vector<2x1x32xf32> to vector<2x8x32xf32>
    %55 = arith.mulf %53, %54 : vector<2x8x32xf32>
    %56 = arith.addf %50, %55 : vector<2x8x32xf32>
    %57 = vector.extract_strided_slice %38 {offsets = [0, 0, 3], sizes = [2, 8, 1], strides = [1, 1, 1]} : vector<2x8x8xf32> to vector<2x8x1xf32>
    %58 = vector.extract_strided_slice %39 {offsets = [0, 3, 0], sizes = [2, 1, 32], strides = [1, 1, 1]} : vector<2x8x32xf32> to vector<2x1x32xf32>
    %59 = vector.broadcast %57 : vector<2x8x1xf32> to vector<2x8x32xf32>
    %60 = vector.broadcast %58 : vector<2x1x32xf32> to vector<2x8x32xf32>
    %61 = arith.mulf %59, %60 : vector<2x8x32xf32>
    %62 = arith.addf %56, %61 : vector<2x8x32xf32>
    %63 = vector.extract_strided_slice %38 {offsets = [0, 0, 4], sizes = [2, 8, 1], strides = [1, 1, 1]} : vector<2x8x8xf32> to vector<2x8x1xf32>
    %64 = vector.extract_strided_slice %39 {offsets = [0, 4, 0], sizes = [2, 1, 32], strides = [1, 1, 1]} : vector<2x8x32xf32> to vector<2x1x32xf32>
    %65 = vector.broadcast %63 : vector<2x8x1xf32> to vector<2x8x32xf32>
    %66 = vector.broadcast %64 : vector<2x1x32xf32> to vector<2x8x32xf32>
    %67 = arith.mulf %65, %66 : vector<2x8x32xf32>
    %68 = arith.addf %62, %67 : vector<2x8x32xf32>
    %69 = vector.extract_strided_slice %38 {offsets = [0, 0, 5], sizes = [2, 8, 1], strides = [1, 1, 1]} : vector<2x8x8xf32> to vector<2x8x1xf32>
    %70 = vector.extract_strided_slice %39 {offsets = [0, 5, 0], sizes = [2, 1, 32], strides = [1, 1, 1]} : vector<2x8x32xf32> to vector<2x1x32xf32>
    %71 = vector.broadcast %69 : vector<2x8x1xf32> to vector<2x8x32xf32>
    %72 = vector.broadcast %70 : vector<2x1x32xf32> to vector<2x8x32xf32>
    %73 = arith.mulf %71, %72 : vector<2x8x32xf32>
    %74 = arith.addf %68, %73 : vector<2x8x32xf32>
    %75 = vector.extract_strided_slice %38 {offsets = [0, 0, 6], sizes = [2, 8, 1], strides = [1, 1, 1]} : vector<2x8x8xf32> to vector<2x8x1xf32>
    %76 = vector.extract_strided_slice %39 {offsets = [0, 6, 0], sizes = [2, 1, 32], strides = [1, 1, 1]} : vector<2x8x32xf32> to vector<2x1x32xf32>
    %77 = vector.broadcast %75 : vector<2x8x1xf32> to vector<2x8x32xf32>
    %78 = vector.broadcast %76 : vector<2x1x32xf32> to vector<2x8x32xf32>
    %79 = arith.mulf %77, %78 : vector<2x8x32xf32>
    %80 = arith.addf %74, %79 : vector<2x8x32xf32>
    %81 = vector.extract_strided_slice %38 {offsets = [0, 0, 7], sizes = [2, 8, 1], strides = [1, 1, 1]} : vector<2x8x8xf32> to vector<2x8x1xf32>
    %82 = vector.extract_strided_slice %39 {offsets = [0, 7, 0], sizes = [2, 1, 32], strides = [1, 1, 1]} : vector<2x8x32xf32> to vector<2x1x32xf32>
    %83 = vector.broadcast %81 : vector<2x8x1xf32> to vector<2x8x32xf32>
    %84 = vector.broadcast %82 : vector<2x1x32xf32> to vector<2x8x32xf32>
    %85 = arith.mulf %83, %84 : vector<2x8x32xf32>
    %86 = arith.addf %80, %85 : vector<2x8x32xf32>
    %87 = vector.extract_strided_slice %86 {offsets = [0, 0, 0], sizes = [2, 1, 32], strides = [1, 1, 1]} : vector<2x8x32xf32> to vector<2x1x32xf32>
    %88 = vector.shape_cast %87 : vector<2x1x32xf32> to vector<2x32xf32>
    %c0_10 = arith.constant 0 : index
    %c0_11 = arith.constant 0 : index
    %89 = vector.load %arg6[%c0_10, %c0_11] : memref<2x256xf32, #tpu.memory_space<vmem>>, vector<2x32xf32>
    tpu.vector_store %arg6[%c0_10, %c0_11], %88 {strides = array<i32>} : memref<2x256xf32, #tpu.memory_space<vmem>>, vector<2x32xf32>,
    %90 = vector.extract_strided_slice %86 {offsets = [0, 1, 0], sizes = [2, 1, 32], strides = [1, 1, 1]} : vector<2x8x32xf32> to vector<2x1x32xf32>
    %91 = vector.shape_cast %90 : vector<2x1x32xf32> to vector<2x32xf32>
    %c0_12 = arith.constant 0 : index
    %c32 = arith.constant 32 : index
    %92 = vector.load %arg6[%c0_12, %c32] : memref<2x256xf32, #tpu.memory_space<vmem>>, vector<2x32xf32>
    tpu.vector_store %arg6[%c0_12, %c32], %91 {strides = array<i32>} : memref<2x256xf32, #tpu.memory_space<vmem>>, vector<2x32xf32>,
    %93 = vector.extract_strided_slice %86 {offsets = [0, 2, 0], sizes = [2, 1, 32], strides = [1, 1, 1]} : vector<2x8x32xf32> to vector<2x1x32xf32>
    %94 = vector.shape_cast %93 : vector<2x1x32xf32> to vector<2x32xf32>
    %c0_13 = arith.constant 0 : index
    %c64 = arith.constant 64 : index
    %95 = vector.load %arg6[%c0_13, %c64] : memref<2x256xf32, #tpu.memory_space<vmem>>, vector<2x32xf32>
    tpu.vector_store %arg6[%c0_13, %c64], %94 {strides = array<i32>} : memref<2x256xf32, #tpu.memory_space<vmem>>, vector<2x32xf32>,
    %96 = vector.extract_strided_slice %86 {offsets = [0, 3, 0], sizes = [2, 1, 32], strides = [1, 1, 1]} : vector<2x8x32xf32> to vector<2x1x32xf32>
    %97 = vector.shape_cast %96 : vector<2x1x32xf32> to vector<2x32xf32>
    %c0_14 = arith.constant 0 : index
    %c96 = arith.constant 96 : index
    %98 = vector.load %arg6[%c0_14, %c96] : memref<2x256xf32, #tpu.memory_space<vmem>>, vector<2x32xf32>
    tpu.vector_store %arg6[%c0_14, %c96], %97 {strides = array<i32>} : memref<2x256xf32, #tpu.memory_space<vmem>>, vector<2x32xf32>,
    %99 = vector.extract_strided_slice %86 {offsets = [0, 4, 0], sizes = [2, 1, 32], strides = [1, 1, 1]} : vector<2x8x32xf32> to vector<2x1x32xf32>
    %100 = vector.shape_cast %99 : vector<2x1x32xf32> to vector<2x32xf32>
    %c0_15 = arith.constant 0 : index
    %c128 = arith.constant 128 : index
    %101 = vector.load %arg6[%c0_15, %c128] : memref<2x256xf32, #tpu.memory_space<vmem>>, vector<2x32xf32>
    tpu.vector_store %arg6[%c0_15, %c128], %100 {strides = array<i32>} : memref<2x256xf32, #tpu.memory_space<vmem>>, vector<2x32xf32>,
    %102 = vector.extract_strided_slice %86 {offsets = [0, 5, 0], sizes = [2, 1, 32], strides = [1, 1, 1]} : vector<2x8x32xf32> to vector<2x1x32xf32>
    %103 = vector.shape_cast %102 : vector<2x1x32xf32> to vector<2x32xf32>
    %c0_16 = arith.constant 0 : index
    %c160 = arith.constant 160 : index
    %104 = vector.load %arg6[%c0_16, %c160] : memref<2x256xf32, #tpu.memory_space<vmem>>, vector<2x32xf32>
    tpu.vector_store %arg6[%c0_16, %c160], %103 {strides = array<i32>} : memref<2x256xf32, #tpu.memory_space<vmem>>, vector<2x32xf32>,
    %105 = vector.extract_strided_slice %86 {offsets = [0, 6, 0], sizes = [2, 1, 32], strides = [1, 1, 1]} : vector<2x8x32xf32> to vector<2x1x32xf32>
    %106 = vector.shape_cast %105 : vector<2x1x32xf32> to vector<2x32xf32>
    %c0_17 = arith.constant 0 : index
    %c192 = arith.constant 192 : index
    %107 = vector.load %arg6[%c0_17, %c192] : memref<2x256xf32, #tpu.memory_space<vmem>>, vector<2x32xf32>
    tpu.vector_store %arg6[%c0_17, %c192], %106 {strides = array<i32>} : memref<2x256xf32, #tpu.memory_space<vmem>>, vector<2x32xf32>,
    %108 = vector.extract_strided_slice %86 {offsets = [0, 7, 0], sizes = [2, 1, 32], strides = [1, 1, 1]} : vector<2x8x32xf32> to vector<2x1x32xf32>
    %109 = vector.shape_cast %108 : vector<2x1x32xf32> to vector<2x32xf32>
    %c0_18 = arith.constant 0 : index
    %c224 = arith.constant 224 : index
    %110 = vector.load %arg6[%c0_18, %c224] : memref<2x256xf32, #tpu.memory_space<vmem>>, vector<2x32xf32>
    tpu.vector_store %arg6[%c0_18, %c224], %109 {strides = array<i32>} : memref<2x256xf32, #tpu.memory_space<vmem>>, vector<2x32xf32>,
    %c0_19 = arith.constant 0 : index
    %c0_20 = arith.constant 0 : index
    %111 = vector.load %arg4[%c0_19, %c0_20] : memref<2x128xf32, #tpu.memory_space<vmem>>, vector<2x128xf32>
    %c0_21 = arith.constant 0 : index
    %c0_22 = arith.constant 0 : index
    %112 = vector.load %arg5[%c0_21, %c0_22] : memref<128x256xf32, #tpu.memory_space<vmem>>, vector<128x256xf32>
    %cst_23 = arith.constant dense<0.000000e+00> : vector<2x256xf32>
    %113 = tpu.matmul %111, %112, %cst_23 {dimension_numbers = #tpu.dot_dimension_numbers<[1], [0], [0], [1], [0, 0, 1, 1], [], []>} : vector<2x128xf32>, vector<128x256xf32>, vector<2x256xf32> -> vector<2x256xf32>
    %c0_24 = arith.constant 0 : index
    %c0_25 = arith.constant 0 : index
    %114 = vector.load %arg7[%c0_24, %c0_25] : memref<2x256xf32, #tpu.memory_space<vmem>>, vector<2x256xf32>
    tpu.vector_store %arg7[%c0_24, %c0_25], %113 {strides = array<i32>} : memref<2x256xf32, #tpu.memory_space<vmem>>, vector<2x256xf32>,
    return
  }
  func.func @transform_0(%arg0: i32) -> (i32, i32, i32) {
    %c0_i32 = arith.constant 0 : i32
    %c0_i32_0 = arith.constant 0 : i32
    %c0_i32_1 = arith.constant 0 : i32
    return %arg0, %c0_i32, %c0_i32_0 : i32, i32, i32
  }
  func.func @transform_1(%arg0: i32) -> (i32, i32, i32) {
    %c0_i32 = arith.constant 0 : i32
    %c0_i32_0 = arith.constant 0 : i32
    %c0_i32_1 = arith.constant 0 : i32
    return %arg0, %c0_i32, %c0_i32_0 : i32, i32, i32
  }
  func.func @transform_2(%arg0: i32) -> (i32, i32) {
    %c0_i32 = arith.constant 0 : i32
    %c0_i32_0 = arith.constant 0 : i32
    %c0_i32_1 = arith.constant 0 : i32
    return %c0_i32, %c0_i32_0 : i32, i32
  }
  func.func @transform_3(%arg0: i32) -> (i32, i32) {
    %c0_i32 = arith.constant 0 : i32
    %c0_i32_0 = arith.constant 0 : i32
    return %arg0, %c0_i32 : i32, i32
  }
  func.func @transform_4(%arg0: i32) -> (i32, i32) {
    %c0_i32 = arith.constant 0 : i32
    %c0_i32_0 = arith.constant 0 : i32
    %c0_i32_1 = arith.constant 0 : i32
    return %c0_i32, %c0_i32_0 : i32, i32
  }
  func.func @transform_5(%arg0: i32) -> (i32, i32) {
    %c0_i32 = arith.constant 0 : i32
    %c0_i32_0 = arith.constant 0 : i32
    return %arg0, %c0_i32 : i32, i32
  }
  func.func @transform_6(%arg0: i32) -> (i32, i32) {
    %c0_i32 = arith.constant 0 : i32
    %c0_i32_0 = arith.constant 0 : i32
    return %arg0, %c0_i32 : i32, i32
  }
}

</mosaic_0001>

<llo_original>
// kernel: tpu_custom_call.1
$region0: #{tpu_custom_call.1}
  #allocation0 [shape = 'u32[]', space=smem, size = 0x4, offset = 0x4, fixed_abs, tag = 'smem constant byte address 0x4 - core index']
  #allocation1 [shape = 'u32[144,128]{1,0:T(1,128)}', space=vmem, size = 0x12000, scoped, tag = 'internal scratch']
  %s0 = inlined_call_operand.hbm [shape: f32[2,8,64], index: 0, kind: input, shape index: {}]
  %s1 = inlined_call_operand.hbm [shape: s32[2,8,8], index: 1, kind: input, shape index: {}]
  %s2 = inlined_call_operand.vmem [shape: f32[4,64], index: 2, kind: input, shape index: {}]
  %s3 = inlined_call_operand.vmem [shape: f32[2,128], index: 3, kind: input, shape index: {}]
  %s4 = inlined_call_operand.hbm [shape: f32[128,256], index: 4, kind: input, shape index: {}]
  %s5 = inlined_call_operand.hbm [shape: f32[2,256], index: 5, kind: output, shape index: {0}]
  %s6 = inlined_call_operand.hbm [shape: f32[2,256], index: 6, kind: output, shape index: {1}]
  %7 = xla_tuple %s5, %s6
  %s8 = sld [smem:[#allocation0]]
  $region50: #{tpu_custom_call.1} parent=0
    _
  %s10 = ssub.s32 1, %s8
  %s11 = scalar_select 0, %s10, %s8
  $region1: #{tpu_custom_call.1} parent=0
    #allocation2 [shape = 'u8[8192]{0}', space=vmem, size = 0x2000, scoped, tag = 'input window, operand 0, single buffered']
    #allocation3 [shape = 's32[1]{0}', space=sflag, size = 0x4, scoped, tag = 'scoped memory for tpu_custom_call.1']
    #allocation4 [shape = 's32[1]{0}', space=sflag, size = 0x4, scoped, tag = 'scoped memory for tpu_custom_call.1']
    #allocation5 [shape = 'u8[8192]{0}', space=vmem, size = 0x2000, scoped, tag = 'input window, operand 1, single buffered']
    #allocation6 [shape = 's32[1]{0}', space=sflag, size = 0x4, scoped, tag = 'scoped memory for tpu_custom_call.1']
    #allocation7 [shape = 'u8[131072]{0}', space=vmem, size = 0x20000, scoped, tag = 'input window, operand 4, single buffered']
    #allocation8 [shape = 'u8[2048]{0}', space=vmem, size = 0x800, scoped, tag = 'output window, operand 0, single buffered']
    #allocation9 [shape = 'u8[2048]{0}', space=vmem, size = 0x800, scoped, tag = 'output window, operand 1, single buffered']
    #allocation10 [shape = 's32[1]{0}', space=sflag, size = 0x4, scoped, tag = 'scoped memory for tpu_custom_call.1']
    %12 = vsyncpa [#allocation3], 0
    %13 = vsyncpa [#allocation6], 0
    %14 = vsyncpa [#allocation4], 0
    %15 = vsyncpa [#allocation10], 0
    // Predicated region
    $region2: #{tpu_custom_call.1} parent=1 // pred_check
      _
    $region3: #{tpu_custom_call.1} parent=1 // pred_check_branch
      %17 = sbr.rel (0) target = $region5
    $region4: #{tpu_custom_call.1} parent=1 // pred_region
      %s19 = ssub.s32 256, 256
      %20 = vsyncadd [#allocation3], %s19
      %s21 = sshll.u32 [#allocation2], 4
      %s22 = int_to_ptr.vmem [resolvable:$true] %s21
      %27 = dma.hbm_to_vmem [thread:$0]  %s0, 256, %s22, [#allocation3], 128, 128, 8
    $region5: #{tpu_custom_call.1} parent=1 // pred_fallthru
      _
    // Predicated region
    $region6: #{tpu_custom_call.1} parent=1 // pred_check
      _
    $region7: #{tpu_custom_call.1} parent=1 // pred_check_branch
      %29 = sbr.rel (0) target = $region9
    $region8: #{tpu_custom_call.1} parent=1 // pred_region
      %s31 = ssub.s32 256, 256
      %32 = vsyncadd [#allocation6], %s31
      %s33 = sshll.u32 [#allocation5], 4
      %s34 = int_to_ptr.vmem [resolvable:$true] %s33
      %39 = dma.hbm_to_vmem [thread:$0]  %s1, 256, %s34, [#allocation6], 128, 128, 8
    $region9: #{tpu_custom_call.1} parent=1 // pred_fallthru
      _
    // Predicated region
    $region10: #{tpu_custom_call.1} parent=1 // pred_check
      _
    $region11: #{tpu_custom_call.1} parent=1 // pred_check_branch
      %41 = sbr.rel (0) target = $region13
    $region12: #{tpu_custom_call.1} parent=1 // pred_region
      _
    $region13: #{tpu_custom_call.1} parent=1 // pred_fallthru
      _
    // Predicated region
    $region14: #{tpu_custom_call.1} parent=1 // pred_check
      _
    $region15: #{tpu_custom_call.1} parent=1 // pred_check_branch
      %43 = sbr.rel (0) target = $region17
    $region16: #{tpu_custom_call.1} parent=1 // pred_region
      _
    $region17: #{tpu_custom_call.1} parent=1 // pred_fallthru
      _
    // Predicated region
    $region18: #{tpu_custom_call.1} parent=1 // pred_check
      _
    $region19: #{tpu_custom_call.1} parent=1 // pred_check_branch
      %45 = sbr.rel (0) target = $region21
    $region20: #{tpu_custom_call.1} parent=1 // pred_region
      %s47 = ssub.s32 4096, 4096
      %48 = vsyncadd [#allocation6], %s47
      %s49 = sshll.u32 [#allocation7], 4
      %s50 = int_to_ptr.vmem [resolvable:$true] %s49
      %55 = dma.hbm_to_vmem [thread:$0]  %s4, 4096, %s50, [#allocation6], 256, 256, 16
    $region21: #{tpu_custom_call.1} parent=1 // pred_fallthru
      _
    // Predicated region
    $region22: #{tpu_custom_call.1} parent=1 // pred_check
      _
    $region23: #{tpu_custom_call.1} parent=1 // pred_check_branch
      %57 = sbr.rel (0) target = $region25
    $region24: #{tpu_custom_call.1} parent=1 // pred_region
      %58 = dma.done [#allocation3], 256
    $region25: #{tpu_custom_call.1} parent=1 // pred_fallthru
      _
    // Predicated region
    $region26: #{tpu_custom_call.1} parent=1 // pred_check
      _
    $region27: #{tpu_custom_call.1} parent=1 // pred_check_branch
      %60 = sbr.rel (0) target = $region29
    $region28: #{tpu_custom_call.1} parent=1 // pred_region
      %61 = dma.done [#allocation6], 256
    $region29: #{tpu_custom_call.1} parent=1 // pred_fallthru
      _
    // Predicated region
    $region30: #{tpu_custom_call.1} parent=1 // pred_check
      _
    $region31: #{tpu_custom_call.1} parent=1 // pred_check_branch
      %63 = sbr.rel (0) target = $region33
    $region32: #{tpu_custom_call.1} parent=1 // pred_region
      %64 = dma.done [#allocation6], 4096
    $region33: #{tpu_custom_call.1} parent=1 // pred_fallthru
      _
    %v66 = vld [vmem:[#allocation2] sm:$0xff]
    %v67 = vld [vmem:[#allocation2 + $0x8] sm:$0xff]
    %v68 = vld [vmem:[%s2] sm:$0xf]
    %v71 = vunpack.c.l.s4 1966171168
    %v72 = vunpack.c.0.s8 %v71
    %v73 = vlaneseq
    %v74 = vshrl.u32 %v73, 7
    %v75 = vsub.s32 %v72, %v74
    %v76 = vrot.slane %v68, %v75
    %v77 = vcombine.high %v76, %v76
    %v79 = vunpack.c.l.s4 1966171168
    %v80 = vunpack.c.0.s8 %v79
    %v81 = vlaneseq
    %v82 = vshrl.u32 %v81, 7
    %v83 = vsub.s32 %v80, %v82
    %v84 = vrot.slane %v76, %v83
    %v86 = vunpack.c.l.s4 1966171168
    %v87 = vunpack.c.0.s8 %v86
    %v88 = vlaneseq
    %v89 = vshrl.u32 %v88, 7
    %v90 = vsub.s32 %v87, %v89
    %v91 = vrot.slane %v77, %v90
    %v92 = vcombine.high %v84, %v84
    %v93 = vcombine.high %v91, %v91
    %v94 = vlaneseq
    %v95 = vshrl.u32 %v94, 7
    %v96 = vsub.s32 0, %v95
    %v97 = vrot.slane %v84, %v96
    %v98 = vlaneseq
    %v99 = vshrl.u32 %v98, 7
    %v100 = vsub.s32 0, %v99
    %v101 = vrot.slane %v91, %v100
    %v102 = vlaneseq
    %v103 = vshrl.u32 %v102, 7
    %v104 = vsub.s32 0, %v103
    %v105 = vrot.slane %v92, %v104
    %v106 = vlaneseq
    %v107 = vshrl.u32 %v106, 7
    %v108 = vsub.s32 0, %v107
    %v109 = vrot.slane %v93, %v108
    %v114 = vmul.f32 %v66, %v97
    %v115 = vmul.f32 %v66, %v101
    %v116 = vmul.f32 %v66, %v105
    %v117 = vmul.f32 %v66, %v109
    %v118 = vmul.f32 %v67, %v97
    %v119 = vmul.f32 %v67, %v101
    %v120 = vmul.f32 %v67, %v105
    %v121 = vmul.f32 %v67, %v109
    %v122 = vpack.c.bf16 %v115, %v114
    %v123 = vpack.c.bf16 %v117, %v116
    %v124 = vpack.c.bf16 %v119, %v118
    %v125 = vpack.c.bf16 %v121, %v120
    %v126 = vpack.c.bf16 %v66, %v66
    %v127 = vpack.c.bf16 %v67, %v67
    %vm128 = vcmask 523264
    %v130 = vsel %vm128, %v122, 0
    %v133 = vsel %vm128, %v123, 0
    %v136 = vsel %vm128, %v126, 0
    %138 = vmatprep.subr.bf16.mxu0 0
    %139 = vmatpush1.bf16.xpose.msra.mxu0 %v136
    %140 = vmatprep.subr.bf16.mxu0 0
    %141 = vmatpush1.bf16.xpose.msra.mxu0 0
    %142 = vmatprep.subr.bf16.mxu0 0
    %143 = vmatpush1.bf16.xpose.msra.mxu0 0
    %144 = vmatprep.subr.bf16.mxu0 0
    %145 = vmatpush1.bf16.xpose.msra.mxu0 0
    %146 = vmatprep.subr.bf16.mxu0 0
    %147 = vmatpush1.bf16.xpose.msra.mxu0 0
    %148 = vmatprep.subr.bf16.mxu0 0
    %149 = vmatpush1.bf16.xpose.msra.mxu0 0
    %150 = vmatprep.subr.bf16.mxu0 0
    %151 = vmatpush1.bf16.xpose.msra.mxu0 0
    %152 = vmatprep.subr.bf16.mxu0 0
    %153 = vmatpush1.bf16.xpose.msra.mxu0 0
    %154 = vmatprep.subr.bf16.mxu0 0
    %155 = vmatpush1.bf16.xpose.msra.mxu0 0
    %156 = vmatprep.subr.bf16.mxu0 0
    %157 = vmatpush1.bf16.xpose.msra.mxu0 0
    %158 = vmatprep.subr.bf16.mxu0 0
    %159 = vmatpush1.bf16.xpose.msra.mxu0 0
    %160 = vmatprep.subr.bf16.mxu0 0
    %161 = vmatpush1.bf16.xpose.msra.mxu0 0
    %162 = vmatprep.subr.bf16.mxu0 0
    %163 = vmatpush1.bf16.xpose.msra.mxu0 0
    %164 = vmatprep.subr.bf16.mxu0 0
    %165 = vmatpush1.bf16.xpose.msra.mxu0 0
    %166 = vmatprep.subr.bf16.mxu0 0
    %167 = vmatpush1.bf16.xpose.msra.mxu0 0
    %168 = vmatprep.subr.bf16.mxu0 0
    %169 = vmatpush1.bf16.xpose.msra.mxu0 0
    %170 = vmatprep.mubr.bf16.mxu0 0
    %171 = vmatmul.mubr.bf16.gmra.mrb[0].mxu0 %v130
    %v172 = vpop.f32.mrb[0].mxu0
    %v173 = vadd.f32 0.0, %v172
    %v174 = vpop.f32.mrb[0].mxu0
    %v175 = vpop.f32.mrb[0].mxu0
    %v176 = vadd.f32 0.0, %v175
    %v177 = vpop.f32.mrb[0].mxu0
    %178 = vmatprep.mubr.bf16.mxu0 0
    %179 = vmatmul.mubr.bf16.gmra.mrb[0].mxu0 %v133
    %v180 = vpop.f32.mrb[0].mxu0
    %v181 = vadd.f32 0.0, %v180
    %v182 = vpop.f32.mrb[0].mxu0
    %v183 = vpop.f32.mrb[0].mxu0
    %v184 = vadd.f32 0.0, %v183
    %v185 = vpop.f32.mrb[0].mxu0
    %186 = vdwg.mxu0
    %v188 = vsel %vm128, %v124, 0
    %v191 = vsel %vm128, %v125, 0
    %v194 = vsel %vm128, %v127, 0
    %196 = vmatprep.subr.bf16.mxu0 0
    %197 = vmatpush1.bf16.xpose.msra.mxu0 %v194
    %198 = vmatprep.subr.bf16.mxu0 0
    %199 = vmatpush1.bf16.xpose.msra.mxu0 0
    %200 = vmatprep.subr.bf16.mxu0 0
    %201 = vmatpush1.bf16.xpose.msra.mxu0 0
    %202 = vmatprep.subr.bf16.mxu0 0
    %203 = vmatpush1.bf16.xpose.msra.mxu0 0
    %204 = vmatprep.subr.bf16.mxu0 0
    %205 = vmatpush1.bf16.xpose.msra.mxu0 0
    %206 = vmatprep.subr.bf16.mxu0 0
    %207 = vmatpush1.bf16.xpose.msra.mxu0 0
    %208 = vmatprep.subr.bf16.mxu0 0
    %209 = vmatpush1.bf16.xpose.msra.mxu0 0
    %210 = vmatprep.subr.bf16.mxu0 0
    %211 = vmatpush1.bf16.xpose.msra.mxu0 0
    %212 = vmatprep.subr.bf16.mxu0 0
    %213 = vmatpush1.bf16.xpose.msra.mxu0 0
    %214 = vmatprep.subr.bf16.mxu0 0
    %215 = vmatpush1.bf16.xpose.msra.mxu0 0
    %216 = vmatprep.subr.bf16.mxu0 0
    %217 = vmatpush1.bf16.xpose.msra.mxu0 0
    %218 = vmatprep.subr.bf16.mxu0 0
    %219 = vmatpush1.bf16.xpose.msra.mxu0 0
    %220 = vmatprep.subr.bf16.mxu0 0
    %221 = vmatpush1.bf16.xpose.msra.mxu0 0
    %222 = vmatprep.subr.bf16.mxu0 0
    %223 = vmatpush1.bf16.xpose.msra.mxu0 0
    %224 = vmatprep.subr.bf16.mxu0 0
    %225 = vmatpush1.bf16.xpose.msra.mxu0 0
    %226 = vmatprep.subr.bf16.mxu0 0
    %227 = vmatpush1.bf16.xpose.msra.mxu0 0
    %228 = vmatprep.mubr.bf16.mxu0 0
    %229 = vmatmul.mubr.bf16.gmra.mrb[0].mxu0 %v188
    %v230 = vpop.f32.mrb[0].mxu0
    %v231 = vadd.f32 0.0, %v230
    %v232 = vpop.f32.mrb[0].mxu0
    %v233 = vpop.f32.mrb[0].mxu0
    %v234 = vadd.f32 0.0, %v233
    %v235 = vpop.f32.mrb[0].mxu0
    %236 = vmatprep.mubr.bf16.mxu0 0
    %237 = vmatmul.mubr.bf16.gmra.mrb[0].mxu0 %v191
    %v238 = vpop.f32.mrb[0].mxu0
    %v239 = vadd.f32 0.0, %v238
    %v240 = vpop.f32.mrb[0].mxu0
    %v241 = vpop.f32.mrb[0].mxu0
    %v242 = vadd.f32 0.0, %v241
    %v243 = vpop.f32.mrb[0].mxu0
    %244 = vdwg.mxu0
    %v245 = vld [vmem:[#allocation5] sm:$0xff]
    %v246 = vld [vmem:[#allocation5 + $0x8] sm:$0xff]
    %vm247 = vcmp.eq.s32.totalorder %v245, 1
    %vm248 = vcmp.eq.s32.totalorder %v246, 1
    %v249 = vsel %vm247, %v173, -9e+15
    %v250 = vsel %vm248, %v231, -9e+15
    %vm251 = vcmp.eq.s32.totalorder %v245, 2
    %vm252 = vcmp.eq.s32.totalorder %v246, 2
    %v253 = vsel %vm251, %v176, %v249
    %v254 = vsel %vm252, %v234, %v250
    %vm255 = vcmp.eq.s32.totalorder %v245, 3
    %vm256 = vcmp.eq.s32.totalorder %v246, 3
    %v257 = vsel %vm255, %v181, %v253
    %v258 = vsel %vm256, %v239, %v254
    %vm259 = vcmp.eq.s32.totalorder %v245, 4
    %vm260 = vcmp.eq.s32.totalorder %v246, 4
    %v261 = vsel %vm259, %v184, %v257
    %v262 = vsel %vm260, %v242, %v258
    %vm263 = vcmask 64512
    %v264 = vsel %vm263, %v261, -inf
    %265 = vmax.xlane.f32.xlu0 %v264
    %v266 = vpop.xlane.xlu0 %265
    %v267 = vsel %vm263, %v262, -inf
    %268 = vmax.xlane.f32.xlu0 %v267
    %v269 = vpop.xlane.xlu0 %268
    %v270 = vsub.f32 %v261, %v266
    %v271 = vsub.f32 %v262, %v269
    %v272 = vmul.f32 %v270, 1.442695
    %v273 = vpow.pop %v272
    %v274 = vmul.f32 %v271, 1.442695
    %v275 = vpow.pop %v274
    %v276 = vsel %vm263, %v273, 0.0
    %277 = vadd.xlane.f32.xlu0 %v276
    %v278 = vpop.xlane.xlu0 %277
    %v279 = vsel %vm263, %v275, 0.0
    %280 = vadd.xlane.f32.xlu0 %v279
    %v281 = vpop.xlane.xlu0 %280
    %v282 = vrcp.pop %v278
    %v283 = vrcp.pop %v281
    %v284 = vmul.f32 %v273, %v282
    %v285 = vmul.f32 %v275, %v283
    %287 = vset.pattern.permute.xlu0 0
    %288 = vperm.xlu0 %287, %v284
    %v289 = vpop.permute.xlu0 %288
    %292 = vset.pattern.permute.xlu0 0
    %293 = vperm.xlu0 %292, %v285
    %v294 = vpop.permute.xlu0 %293
    %v296 = vlaneseq
    %v297 = vshrl.u32 %v296, 7
    %v298 = vsub.s32 0, %v297
    %v299 = vrot.slane %v66, %v298
    %v300 = vlaneseq
    %v301 = vshrl.u32 %v300, 7
    %v302 = vsub.s32 0, %v301
    %v303 = vrot.slane %v67, %v302
    %v304 = vmul.f32 %v289, %v299
    %v305 = vmul.f32 %v294, %v303
    %306 = vset.pattern.permute.xlu0 1
    %307 = vperm.xlu0 %306, %v284
    %v308 = vpop.permute.xlu0 %307
    %310 = vset.pattern.permute.xlu0 1
    %311 = vperm.xlu0 %310, %v285
    %v312 = vpop.permute.xlu0 %311
    %v314 = vlaneseq
    %v315 = vshrl.u32 %v314, 7
    %v316 = vsub.s32 1, %v315
    %v317 = vrot.slane %v66, %v316
    %v318 = vlaneseq
    %v319 = vshrl.u32 %v318, 7
    %v320 = vsub.s32 1, %v319
    %v321 = vrot.slane %v67, %v320
    %v322 = vmul.f32 %v308, %v317
    %v323 = vmul.f32 %v312, %v321
    %v324 = vadd.f32 %v304, %v322
    %v325 = vadd.f32 %v305, %v323
    %326 = vset.pattern.permute.xlu0 2
    %327 = vperm.xlu0 %326, %v284
    %v328 = vpop.permute.xlu0 %327
    %330 = vset.pattern.permute.xlu0 2
    %331 = vperm.xlu0 %330, %v285
    %v332 = vpop.permute.xlu0 %331
    %v334 = vlaneseq
    %v335 = vshrl.u32 %v334, 7
    %v336 = vsub.s32 2, %v335
    %v337 = vrot.slane %v66, %v336
    %v338 = vlaneseq
    %v339 = vshrl.u32 %v338, 7
    %v340 = vsub.s32 2, %v339
    %v341 = vrot.slane %v67, %v340
    %v342 = vmul.f32 %v328, %v337
    %v343 = vmul.f32 %v332, %v341
    %v344 = vadd.f32 %v324, %v342
    %v345 = vadd.f32 %v325, %v343
    %346 = vset.pattern.permute.xlu0 3
    %347 = vperm.xlu0 %346, %v284
    %v348 = vpop.permute.xlu0 %347
    %350 = vset.pattern.permute.xlu0 3
    %351 = vperm.xlu0 %350, %v285
    %v352 = vpop.permute.xlu0 %351
    %v354 = vlaneseq
    %v355 = vshrl.u32 %v354, 7
    %v356 = vsub.s32 3, %v355
    %v357 = vrot.slane %v66, %v356
    %v358 = vlaneseq
    %v359 = vshrl.u32 %v358, 7
    %v360 = vsub.s32 3, %v359
    %v361 = vrot.slane %v67, %v360
    %v362 = vmul.f32 %v348, %v357
    %v363 = vmul.f32 %v352, %v361
    %v364 = vadd.f32 %v344, %v362
    %v365 = vadd.f32 %v345, %v363
    %366 = vset.pattern.permute.xlu0 4
    %367 = vperm.xlu0 %366, %v284
    %v368 = vpop.permute.xlu0 %367
    %370 = vset.pattern.permute.xlu0 4
    %371 = vperm.xlu0 %370, %v285
    %v372 = vpop.permute.xlu0 %371
    %v374 = vlaneseq
    %v375 = vshrl.u32 %v374, 7
    %v376 = vsub.s32 4, %v375
    %v377 = vrot.slane %v66, %v376
    %v378 = vlaneseq
    %v379 = vshrl.u32 %v378, 7
    %v380 = vsub.s32 4, %v379
    %v381 = vrot.slane %v67, %v380
    %v382 = vmul.f32 %v368, %v377
    %v383 = vmul.f32 %v372, %v381
    %v384 = vadd.f32 %v364, %v382
    %v385 = vadd.f32 %v365, %v383
    %386 = vset.pattern.permute.xlu0 5
    %387 = vperm.xlu0 %386, %v284
    %v388 = vpop.permute.xlu0 %387
    %390 = vset.pattern.permute.xlu0 5
    %391 = vperm.xlu0 %390, %v285
    %v392 = vpop.permute.xlu0 %391
    %v394 = vlaneseq
    %v395 = vshrl.u32 %v394, 7
    %v396 = vsub.s32 5, %v395
    %v397 = vrot.slane %v66, %v396
    %v398 = vlaneseq
    %v399 = vshrl.u32 %v398, 7
    %v400 = vsub.s32 5, %v399
    %v401 = vrot.slane %v67, %v400
    %v402 = vmul.f32 %v388, %v397
    %v403 = vmul.f32 %v392, %v401
    %v404 = vadd.f32 %v384, %v402
    %v405 = vadd.f32 %v385, %v403
    %406 = vset.pattern.permute.xlu0 6
    %407 = vperm.xlu0 %406, %v284
    %v408 = vpop.permute.xlu0 %407
    %410 = vset.pattern.permute.xlu0 6
    %411 = vperm.xlu0 %410, %v285
    %v412 = vpop.permute.xlu0 %411
    %v414 = vlaneseq
    %v415 = vshrl.u32 %v414, 7
    %v416 = vsub.s32 6, %v415
    %v417 = vrot.slane %v66, %v416
    %v418 = vlaneseq
    %v419 = vshrl.u32 %v418, 7
    %v420 = vsub.s32 6, %v419
    %v421 = vrot.slane %v67, %v420
    %v422 = vmul.f32 %v408, %v417
    %v423 = vmul.f32 %v412, %v421
    %v424 = vadd.f32 %v404, %v422
    %v425 = vadd.f32 %v405, %v423
    %426 = vset.pattern.permute.xlu0 7
    %427 = vperm.xlu0 %426, %v284
    %v428 = vpop.permute.xlu0 %427
    %430 = vset.pattern.permute.xlu0 7
    %431 = vperm.xlu0 %430, %v285
    %v432 = vpop.permute.xlu0 %431
    %v434 = vlaneseq
    %v435 = vshrl.u32 %v434, 7
    %v436 = vsub.s32 7, %v435
    %v437 = vrot.slane %v66, %v436
    %v438 = vlaneseq
    %v439 = vshrl.u32 %v438, 7
    %v440 = vsub.s32 7, %v439
    %v441 = vrot.slane %v67, %v440
    %v442 = vmul.f32 %v428, %v437
    %v443 = vmul.f32 %v432, %v441
    %v444 = vadd.f32 %v424, %v442
    %v445 = vadd.f32 %v425, %v443
    %v449 = vunpack.c.l.s4 1983009808
    %v450 = vunpack.c.0.s8 %v449
    %v451 = vlaneseq
    %v452 = vshrl.u32 %v451, 7
    %v453 = vsub.s32 %v450, %v452
    %v454 = vrot.slane %v444, %v453
    %v456 = vunpack.c.l.s4 1983009808
    %v457 = vunpack.c.0.s8 %v456
    %v458 = vlaneseq
    %v459 = vshrl.u32 %v458, 7
    %v460 = vsub.s32 %v457, %v459
    %v461 = vrot.slane %v445, %v460
    %vm462 = vcmask 1044484
    %v463 = vsel %vm462, %v454, %v454
    %vm464 = vcmask 1046534
    %v465 = vsel %vm464, %v454, %v463
    %v466 = vrot.slane %v461, 7
    %vm467 = vcmask 1041409
    %v468 = vsel %vm467, %v466, %v465
    %vm469 = vcmask 1043459
    %v470 = vsel %vm469, %v466, %v468
    %vm471 = vcmask 1045509
    %v472 = vsel %vm471, %v466, %v470
    %vm473 = vcmask 1047559
    %v474 = vsel %vm473, %v466, %v472
    %vm476 = vcmask 254976
    %477 = vst.msk [vmem:[#allocation8] sm:$0x3] %vm476, %v474
    %v478 = vrot.slane %v454, 1
    %v479 = vsel %vm462, %v478, %v478
    %v480 = vsel %vm464, %v478, %v479
    %v481 = vsel %vm467, %v461, %v480
    %v482 = vsel %vm469, %v461, %v481
    %v483 = vsel %vm471, %v461, %v482
    %v484 = vsel %vm473, %v461, %v483
    %485 = vrot.lane.b32.xlu0 %v484, 32
    %v486 = vpop.permute.xlu0 %485
    %vm488 = vcmask 517376
    %489 = vst.msk [vmem:[#allocation8] sm:$0x3] %vm488, %v486
    %v490 = vcombine.high %v454, %v454
    %v491 = vcombine.high %v461, %v461
    %v492 = vsel %vm462, %v490, %v490
    %v493 = vsel %vm464, %v490, %v492
    %v494 = vrot.slane %v491, 7
    %v495 = vsel %vm467, %v494, %v493
    %v496 = vsel %vm469, %v494, %v495
    %v497 = vsel %vm471, %v494, %v496
    %v498 = vsel %vm473, %v494, %v497
    %499 = vrot.lane.b32.xlu0 %v498, 64
    %v500 = vpop.permute.xlu0 %499
    %vm502 = vcmask 779776
    %503 = vst.msk [vmem:[#allocation8] sm:$0x3] %vm502, %v500
    %v504 = vrot.slane %v490, 1
    %v505 = vsel %vm462, %v504, %v504
    %v506 = vsel %vm464, %v504, %v505
    %v507 = vsel %vm467, %v491, %v506
    %v508 = vsel %vm469, %v491, %v507
    %v509 = vsel %vm471, %v491, %v508
    %v510 = vsel %vm473, %v491, %v509
    %511 = vrot.lane.b32.xlu0 %v510, 96
    %v512 = vpop.permute.xlu0 %511
    %vm514 = vcmask 1042176
    %515 = vst.msk [vmem:[#allocation8] sm:$0x3] %vm514, %v512
    %v516 = vcombine.high %v444, %v444
    %v518 = vunpack.c.l.s4 1983009808
    %v519 = vunpack.c.0.s8 %v518
    %v520 = vlaneseq
    %v521 = vshrl.u32 %v520, 7
    %v522 = vsub.s32 %v519, %v521
    %v523 = vrot.slane %v516, %v522
    %v524 = vcombine.high %v445, %v445
    %v526 = vunpack.c.l.s4 1983009808
    %v527 = vunpack.c.0.s8 %v526
    %v528 = vlaneseq
    %v529 = vshrl.u32 %v528, 7
    %v530 = vsub.s32 %v527, %v529
    %v531 = vrot.slane %v524, %v530
    %v532 = vsel %vm462, %v523, %v523
    %v533 = vsel %vm464, %v523, %v532
    %v534 = vrot.slane %v531, 7
    %v535 = vsel %vm467, %v534, %v533
    %v536 = vsel %vm469, %v534, %v535
    %v537 = vsel %vm471, %v534, %v536
    %v538 = vsel %vm473, %v534, %v537
    %540 = vst.msk [vmem:[#allocation8 + $0x2] sm:$0x3] %vm476, %v538
    %v541 = vrot.slane %v523, 1
    %v542 = vsel %vm462, %v541, %v541
    %v543 = vsel %vm464, %v541, %v542
    %v544 = vsel %vm467, %v531, %v543
    %v545 = vsel %vm469, %v531, %v544
    %v546 = vsel %vm471, %v531, %v545
    %v547 = vsel %vm473, %v531, %v546
    %548 = vrot.lane.b32.xlu0 %v547, 32
    %v549 = vpop.permute.xlu0 %548
    %551 = vst.msk [vmem:[#allocation8 + $0x2] sm:$0x3] %vm488, %v549
    %v552 = vcombine.high %v523, %v523
    %v553 = vcombine.high %v531, %v531
    %v554 = vsel %vm462, %v552, %v552
    %v555 = vsel %vm464, %v552, %v554
    %v556 = vrot.slane %v553, 7
    %v557 = vsel %vm467, %v556, %v555
    %v558 = vsel %vm469, %v556, %v557
    %v559 = vsel %vm471, %v556, %v558
    %v560 = vsel %vm473, %v556, %v559
    %561 = vrot.lane.b32.xlu0 %v560, 64
    %v562 = vpop.permute.xlu0 %561
    %564 = vst.msk [vmem:[#allocation8 + $0x2] sm:$0x3] %vm502, %v562
    %v565 = vrot.slane %v552, 1
    %v566 = vsel %vm462, %v565, %v565
    %v567 = vsel %vm464, %v565, %v566
    %v568 = vsel %vm467, %v553, %v567
    %v569 = vsel %vm469, %v553, %v568
    %v570 = vsel %vm471, %v553, %v569
    %v571 = vsel %vm473, %v553, %v570
    %572 = vrot.lane.b32.xlu0 %v571, 96
    %v573 = vpop.permute.xlu0 %572
    %575 = vst.msk [vmem:[#allocation8 + $0x2] sm:$0x3] %vm514, %v573
    %v576 = vld [vmem:[%s3] sm:$0x3]
    %v577 = vld [vmem:[#allocation7] sm:$0xff]
    %v578 = vld [vmem:[#allocation7 + $0x8] sm:$0xff]
    %v579 = vld [vmem:[#allocation7 + $0x10] sm:$0xff]
    %v580 = vld [vmem:[#allocation7 + $0x18] sm:$0xff]
    %v581 = vld [vmem:[#allocation7 + $0x20] sm:$0xff]
    %v582 = vld [vmem:[#allocation7 + $0x28] sm:$0xff]
    %v583 = vld [vmem:[#allocation7 + $0x30] sm:$0xff]
    %v584 = vld [vmem:[#allocation7 + $0x38] sm:$0xff]
    %v585 = vld [vmem:[#allocation7 + $0x40] sm:$0xff]
    %v586 = vld [vmem:[#allocation7 + $0x48] sm:$0xff]
    %v587 = vld [vmem:[#allocation7 + $0x50] sm:$0xff]
    %v588 = vld [vmem:[#allocation7 + $0x58] sm:$0xff]
    %v589 = vld [vmem:[#allocation7 + $0x60] sm:$0xff]
    %v590 = vld [vmem:[#allocation7 + $0x68] sm:$0xff]
    %v591 = vld [vmem:[#allocation7 + $0x70] sm:$0xff]
    %v592 = vld [vmem:[#allocation7 + $0x78] sm:$0xff]
    %v593 = vld [vmem:[#allocation7 + $0x80] sm:$0xff]
    %v594 = vld [vmem:[#allocation7 + $0x88] sm:$0xff]
    %v595 = vld [vmem:[#allocation7 + $0x90] sm:$0xff]
    %v596 = vld [vmem:[#allocation7 + $0x98] sm:$0xff]
    %v597 = vld [vmem:[#allocation7 + $0xa0] sm:$0xff]
    %v598 = vld [vmem:[#allocation7 + $0xa8] sm:$0xff]
    %v599 = vld [vmem:[#allocation7 + $0xb0] sm:$0xff]
    %v600 = vld [vmem:[#allocation7 + $0xb8] sm:$0xff]
    %v601 = vld [vmem:[#allocation7 + $0xc0] sm:$0xff]
    %v602 = vld [vmem:[#allocation7 + $0xc8] sm:$0xff]
    %v603 = vld [vmem:[#allocation7 + $0xd0] sm:$0xff]
    %v604 = vld [vmem:[#allocation7 + $0xd8] sm:$0xff]
    %v605 = vld [vmem:[#allocation7 + $0xe0] sm:$0xff]
    %v606 = vld [vmem:[#allocation7 + $0xe8] sm:$0xff]
    %v607 = vld [vmem:[#allocation7 + $0xf0] sm:$0xff]
    %v608 = vld [vmem:[#allocation7 + $0xf8] sm:$0xff]
    %609 = vmatprep.subr.mxu0 %v578
    %610 = vmatpush1.msra.mxu0 %v577
    %611 = vmatprep.subr.mxu0 %v580
    %612 = vmatpush1.msra.mxu0 %v579
    %613 = vmatprep.subr.mxu0 %v582
    %614 = vmatpush1.msra.mxu0 %v581
    %615 = vmatprep.subr.mxu0 %v584
    %616 = vmatpush1.msra.mxu0 %v583
    %617 = vmatprep.subr.mxu0 %v586
    %618 = vmatpush1.msra.mxu0 %v585
    %619 = vmatprep.subr.mxu0 %v588
    %620 = vmatpush1.msra.mxu0 %v587
    %621 = vmatprep.subr.mxu0 %v590
    %622 = vmatpush1.msra.mxu0 %v589
    %623 = vmatprep.subr.mxu0 %v592
    %624 = vmatpush1.msra.mxu0 %v591
    %625 = vmatprep.subr.mxu0 %v594
    %626 = vmatpush1.msra.mxu0 %v593
    %627 = vmatprep.subr.mxu0 %v596
    %628 = vmatpush1.msra.mxu0 %v595
    %629 = vmatprep.subr.mxu0 %v598
    %630 = vmatpush1.msra.mxu0 %v597
    %631 = vmatprep.subr.mxu0 %v600
    %632 = vmatpush1.msra.mxu0 %v599
    %633 = vmatprep.subr.mxu0 %v602
    %634 = vmatpush1.msra.mxu0 %v601
    %635 = vmatprep.subr.mxu0 %v604
    %636 = vmatpush1.msra.mxu0 %v603
    %637 = vmatprep.subr.mxu0 %v606
    %638 = vmatpush1.msra.mxu0 %v605
    %639 = vmatprep.subr.mxu0 %v608
    %640 = vmatpush1.msra.mxu0 %v607
    %641 = vmatprep.subr.mxu0 0.0
    %642 = vmatpush1.msra.mxu0 0.0
    %643 = vmatprep.subr.mxu0 0.0
    %644 = vmatpush1.msra.mxu0 0.0
    %645 = vmatprep.subr.mxu0 0.0
    %646 = vmatpush1.msra.mxu0 0.0
    %647 = vmatprep.subr.mxu0 0.0
    %648 = vmatpush1.msra.mxu0 0.0
    %649 = vmatprep.subr.mxu0 0.0
    %650 = vmatpush1.msra.mxu0 0.0
    %651 = vmatprep.subr.mxu0 0.0
    %652 = vmatpush1.msra.mxu0 0.0
    %653 = vmatprep.subr.mxu0 0.0
    %654 = vmatpush1.msra.mxu0 0.0
    %655 = vmatprep.subr.mxu0 0.0
    %656 = vmatpush1.msra.mxu0 0.0
    %657 = vmatprep.subr.mxu0 0.0
    %658 = vmatpush1.msra.mxu0 0.0
    %659 = vmatprep.subr.mxu0 0.0
    %660 = vmatpush1.msra.mxu0 0.0
    %661 = vmatprep.subr.mxu0 0.0
    %662 = vmatpush1.msra.mxu0 0.0
    %663 = vmatprep.subr.mxu0 0.0
    %664 = vmatpush1.msra.mxu0 0.0
    %665 = vmatprep.subr.mxu0 0.0
    %666 = vmatpush1.msra.mxu0 0.0
    %667 = vmatprep.subr.mxu0 0.0
    %668 = vmatpush1.msra.mxu0 0.0
    %669 = vmatprep.subr.mxu0 0.0
    %670 = vmatpush1.msra.mxu0 0.0
    %671 = vmatprep.subr.mxu0 0.0
    %672 = vmatpush1.msra.mxu0 0.0
    %673 = vmatprep.mubr.f32.mxu0 0.0
    %674 = vmatmul.mubr.f32.gmra.mrb[0].mxu0 %v576
    %v675 = vpop.f32.mrb[0].mxu0
    %v676 = vadd.f32 0.0, %v675
    %v677 = vpop.f32.mrb[0].mxu0
    %v678 = vadd.f32 0.0, %v677
    %679 = vdwg.mxu0
    %v682 = vcombine.low %v676, %v678
    %v684 = vunpack.c.l.s4 1983009808
    %v685 = vunpack.c.0.s8 %v684
    %v686 = vlaneseq
    %v687 = vshrl.u32 %v686, 7
    %v688 = vsub.s32 %v685, %v687
    %v689 = vrot.slane %v682, %v688
    %691 = vst [vmem:[#allocation9] sm:$0xf] %v689
    // Predicated region
    $region34: #{tpu_custom_call.1} parent=1 // pred_check
      _
    $region35: #{tpu_custom_call.1} parent=1 // pred_check_branch
      %693 = sbr.rel (0) target = $region37
    $region36: #{tpu_custom_call.1} parent=1 // pred_region
      %s695 = ssub.s32 64, 64
      %696 = vsyncadd [#allocation4], %s695
      %s698 = sshll.u32 [#allocation8], 4
      %s699 = int_to_ptr.vmem [resolvable:$true] %s698
      %701 = dma.vmem_to_hbm [thread:$0]  %s699, 64, %s5, [#allocation4]
    $region37: #{tpu_custom_call.1} parent=1 // pred_fallthru
      _
    // Predicated region
    $region38: #{tpu_custom_call.1} parent=1 // pred_check
      _
    $region39: #{tpu_custom_call.1} parent=1 // pred_check_branch
      %703 = sbr.rel (0) target = $region41
    $region40: #{tpu_custom_call.1} parent=1 // pred_region
      %s705 = ssub.s32 64, 64
      %706 = vsyncadd [#allocation10], %s705
      %s708 = sshll.u32 [#allocation9], 4
      %s709 = int_to_ptr.vmem [resolvable:$true] %s708
      %711 = dma.vmem_to_hbm [thread:$0]  %s709, 64, %s6, [#allocation10]
    $region41: #{tpu_custom_call.1} parent=1 // pred_fallthru
      _
    // Predicated region
    $region42: #{tpu_custom_call.1} parent=1 // pred_check
      _
    $region43: #{tpu_custom_call.1} parent=1 // pred_check_branch
      %713 = sbr.rel (0) target = $region45
    $region44: #{tpu_custom_call.1} parent=1 // pred_region
      %714 = dma.done [#allocation4], 64
    $region45: #{tpu_custom_call.1} parent=1 // pred_fallthru
      _
    // Predicated region
    $region46: #{tpu_custom_call.1} parent=1 // pred_check
      _
    $region47: #{tpu_custom_call.1} parent=1 // pred_check_branch
      %716 = sbr.rel (0) target = $region49
    $region48: #{tpu_custom_call.1} parent=1 // pred_region
      %717 = dma.done [#allocation10], 64
    $region49: #{tpu_custom_call.1} parent=1 // pred_fallthru
      _
    %718 = vsyncpa [#allocation3], 1
    %719 = vsyncpa [#allocation6], 1
    %720 = vsyncpa [#allocation4], 1
    %721 = vsyncpa [#allocation10], 1

</llo_original>
